<compile_context>
chip_gen: v6e
topology: v6e:2x2x1
jax: 0.10.0
libtpu: 0.0.40
codegen_flags: <defaults>
</compile_context>

<pallas_src>
import functools

import jax
import jax.numpy as jnp
from jax.experimental import pallas as pl
from jax.experimental.pallas import tpu as pltpu

# ----------------------------- configuration --------------------------------
BATCH = 2                 # leading batch dim of the example input
SEQ = 8                   # second leading dim (module applies to last dim)
D_MODEL = 32              # d_model
HIDDEN = D_MODEL // 2     # 16
N_CLASS = 8               # n_class
LN_EPS = 1e-5             # nn.LayerNorm default eps
NEG_SLOPE = 0.2           # LeakyReLU negative slope
TM_MAX = 512              # row-tile cap once M = B*S grows past toy size


# ------------------------------- kernel --------------------------------------
def mymodel2_kernel(x_ref, w1_ref, w2_ref, bias_ref, o_ref, *, hidden, n_class):
    """x_ref:(TM,D)  w1_ref:(D,H)  w2_ref:(H,C) [LN-affine folded]
    bias_ref:(1,H+C) = [b1 | b2']  o_ref:(TM,C)."""
    x = x_ref[...].astype(jnp.float32)                       # cast in-kernel

    bias = bias_ref[...]
    b1 = bias[:, :hidden]                                    # (1, H)
    b2 = bias[:, hidden:hidden + n_class]                    # (1, C)

    # ---- fc1 + LeakyReLU(0.2) ----------------------------------------------
    h = jnp.dot(x, w1_ref[...], preferred_element_type=jnp.float32) + b1
    h = jnp.where(h >= 0.0, h, NEG_SLOPE * h)                # (TM, H)

    # ---- dropout: identity (eval mode) --------------------------------------

    # ---- LayerNorm (affine folded into fc2 offline) --------------------------
    # Two independent reductions -> shorter critical chain, no broadcast temp.
    inv_h = 1.0 / float(hidden)
    s1 = jnp.sum(h, axis=-1, keepdims=True)
    s2 = jnp.sum(h * h, axis=-1, keepdims=True)
    mu = s1 * inv_h
    var = s2 * inv_h - mu * mu
    hn = (h - mu) * jax.lax.rsqrt(var + LN_EPS)              # (TM, H)

    # ---- fc2 with folded gamma/beta (+ identity dropout) ---------------------
    # Default MXU precision kept (error << 1e-3 at this d_model); set
    # precision=HIGHEST here if bit-closeness to PyTorch is required.
    out = jnp.dot(hn, w2_ref[...], preferred_element_type=jnp.float32) + b2
    o_ref[...] = out.astype(o_ref.dtype)                     # (TM, C)


# ------------------------------- wrapper --------------------------------------
@jax.jit
def mymodel2_forward(x, w1t, w2f, bias_pack):
    """x: (..., d_model).  w1t:(D,H), w2f:(H,C) LN-folded, bias_pack:(1,H+C).

    Returns (..., n_class)."""
    lead = x.shape[:-1]
    d = x.shape[-1]
    hidden = w1t.shape[1]
    n_class = w2f.shape[1]

    m = 1
    for s in lead:
        m *= s

    x2 = x.reshape(m, d)                     # free reshape; no astype (kernel casts)

    tm = m if m <= TM_MAX else TM_MAX
    m_pad = -(-m // tm) * tm                 # pad rows only when M > TM_MAX
    if m_pad != m:
        x2 = jnp.pad(x2, ((0, m_pad - m), (0, 0)))
    grid = (m_pad // tm,)

    kern = functools.partial(mymodel2_kernel, hidden=hidden, n_class=n_class)

    cost = pl.CostEstimate(
        flops=2 * m * (d * hidden + hidden * n_class),
        transcendentals=m,                   # one rsqrt per row
        bytes_accessed=4 * (m * d + m * n_class
                            + d * hidden + hidden * n_class + hidden + n_class),
    )

    out = pl.pallas_call(
        kern,
        out_shape=jax.ShapeDtypeStruct((m_pad, n_class), jnp.float32),
        grid=grid,
        in_specs=[
            pl.BlockSpec((tm, d), lambda i: (i, 0)),                 # x rows
            pl.BlockSpec((d, hidden), lambda i: (0, 0)),             # w1t (resident)
            pl.BlockSpec((hidden, n_class), lambda i: (0, 0)),       # w2 folded
            pl.BlockSpec((1, hidden + n_class), lambda i: (0, 0)),   # packed biases
        ],
        out_specs=pl.BlockSpec((tm, n_class), lambda i: (i, 0)),
        compiler_params=pltpu.CompilerParams(
            dimension_semantics=("parallel",)),
        cost_estimate=cost,
    )(x2, w1t, w2f, bias_pack)

    if m_pad != m:
        out = out[:m]
    return out.reshape(*lead, n_class)


# ----------------------------- pure-JAX reference -----------------------------
def reference(x, params):
    """Unfolded reference in the original (PyTorch-layout) parameterization."""
    hp = jax.lax.Precision.HIGHEST
    x = x.astype(jnp.float32)
    h = jnp.einsum("...d,hd->...h", x, params["fc1_w"], precision=hp) + params["fc1_b"]
    h = jnp.where(h >= 0.0, h, NEG_SLOPE * h)
    mu = jnp.mean(h, -1, keepdims=True)
    var = jnp.mean((h - mu) ** 2, -1, keepdims=True)
    h = (h - mu) / jnp.sqrt(var + LN_EPS)
    h = h * params["ln_g"] + params["ln_b"]
    out = jnp.einsum("...h,ch->...c", h, params["fc2_w"], precision=hp) + params["fc2_b"]
    return out


# --------------------------------- main ---------------------------------------
if __name__ == "__main__":
    key = jax.random.PRNGKey(0)
    keys = jax.random.split(key, 8)

    def init(k, shape, scale=0.1):
        return (scale * jax.random.normal(k, shape)).astype(jnp.float32)

    # Parameters in PyTorch layout (Linear weight: (out_features, in_features)).
    params = {
        "fc1_w": init(keys[0], (HIDDEN, D_MODEL)),
        "fc1_b": init(keys[1], (HIDDEN,)),
        "fc2_w": init(keys[2], (N_CLASS, HIDDEN)),
        "fc2_b": init(keys[3], (N_CLASS,)),
        "ln_g": (1.0 + 0.1 * jax.random.normal(keys[4], (HIDDEN,))).astype(jnp.float32),
        "ln_b": init(keys[5], (HIDDEN,)),
    }

    # One-time weight preparation OUTSIDE the jitted call path:
    #  * transpose to (in, out) so the kernel computes plain x @ W,
    #  * fold LayerNorm gamma/beta into fc2,
    #  * pack both biases into a single (1, H+C) slab.
    w1t = jnp.asarray(params["fc1_w"].T)                         # (D, H)
    w2t = jnp.asarray(params["fc2_w"].T)                         # (H, C)
    w2f = params["ln_g"][:, None] * w2t                          # (H, C) folded gamma
    b2f = params["ln_b"] @ w2t + params["fc2_b"]                 # (C,)   folded beta
    bias_pack = jnp.concatenate([params["fc1_b"], b2f]).reshape(1, HIDDEN + N_CLASS)

    x = jax.random.normal(keys[6], (BATCH, SEQ, D_MODEL), dtype=jnp.float32)

    out = mymodel2_forward(x, w1t, w2f, bias_pack)
    out = jax.block_until_ready(out)

    ref_out = reference(x, params)
    err = float(jnp.max(jnp.abs(out - ref_out)))
    assert out.shape == (BATCH, SEQ, N_CLASS), out.shape
    assert err < 1e-3, err

    print("KERNEL_OK")
</pallas_src>

<mosaic_0001>
module attributes {stable_mosaic.version = 11 : i64} {
  func.func @mymodel2_kernel(%arg0: i32, %arg1: memref<16x32xf32, #tpu.memory_space<vmem>>, %arg2: memref<32x16xf32, #tpu.memory_space<vmem>>, %arg3: memref<16x8xf32, #tpu.memory_space<vmem>>, %arg4: memref<1x24xf32, #tpu.memory_space<vmem>>, %arg5: memref<16x8xf32, #tpu.memory_space<vmem>>) attributes {dimension_semantics = [#tpu.dimension_semantics<parallel>], iteration_bounds = array<i64: 1>, scalar_prefetch = 0 : i64, scratch_operands = 0 : i64, tpu.core_type = #tpu.core_type<tc>, window_params = [{transform_indices = @transform_0, window_bounds = array<i64: 16, 32>}, {pipeline_mode = #tpu.pipeline_mode<synchronous>, transform_indices = @transform_1, window_bounds = array<i64: 32, 16>}, {pipeline_mode = #tpu.pipeline_mode<synchronous>, transform_indices = @transform_2, window_bounds = array<i64: 16, 8>}, {pipeline_mode = #tpu.pipeline_mode<synchronous>, transform_indices = @transform_3, window_bounds = array<i64: 1, 24>}, {transform_indices = @transform_4, window_bounds = array<i64: 16, 8>}]} {
    %c0 = arith.constant 0 : index
    %c0_0 = arith.constant 0 : index
    %0 = vector.load %arg1[%c0, %c0_0] : memref<16x32xf32, #tpu.memory_space<vmem>>, vector<16x32xf32>
    %c0_1 = arith.constant 0 : index
    %c0_2 = arith.constant 0 : index
    %1 = vector.load %arg4[%c0_1, %c0_2] : memref<1x24xf32, #tpu.memory_space<vmem>>, vector<1x24xf32>
    %2 = vector.extract_strided_slice %1 {offsets = [0, 0], sizes = [1, 16], strides = [1, 1]} : vector<1x24xf32> to vector<1x16xf32>
    %3 = vector.extract_strided_slice %1 {offsets = [0, 16], sizes = [1, 8], strides = [1, 1]} : vector<1x24xf32> to vector<1x8xf32>
    %c0_3 = arith.constant 0 : index
    %c0_4 = arith.constant 0 : index
    %4 = vector.load %arg2[%c0_3, %c0_4] : memref<32x16xf32, #tpu.memory_space<vmem>>, vector<32x16xf32>
    %cst = arith.constant dense<0.000000e+00> : vector<16x16xf32>
    %5 = tpu.matmul %0, %4, %cst {dimension_numbers = #tpu.dot_dimension_numbers<[1], [0], [0], [1], [0, 0, 1, 1], [], []>} : vector<16x32xf32>, vector<32x16xf32>, vector<16x16xf32> -> vector<16x16xf32>
    %6 = vector.broadcast %2 : vector<1x16xf32> to vector<16x16xf32>
    %7 = arith.addf %5, %6 : vector<16x16xf32>
    %cst_5 = arith.constant 0.000000e+00 : f32
    %8 = vector.broadcast %cst_5 : f32 to vector<16x16xf32>
    %9 = arith.cmpf oge, %7, %8 : vector<16x16xf32>
    %cst_6 = arith.constant 2.000000e-01 : f32
    %10 = vector.broadcast %cst_6 : f32 to vector<16x16xf32>
    %11 = arith.mulf %10, %7 : vector<16x16xf32>
    %12 = arith.select %9, %7, %11 : vector<16x16xi1>, vector<16x16xf32>
    %cst_7 = arith.constant dense<0.000000e+00> : vector<16xf32>
    %13 = vector.multi_reduction <add>, %12, %cst_7 [1] : vector<16x16xf32> to vector<16xf32>
    %14 = vector.shape_cast %13 : vector<16xf32> to vector<16x1xf32>
    %15 = arith.mulf %12, %12 : vector<16x16xf32>
    %cst_8 = arith.constant dense<0.000000e+00> : vector<16xf32>
    %16 = vector.multi_reduction <add>, %15, %cst_8 [1] : vector<16x16xf32> to vector<16xf32>
    %17 = vector.shape_cast %16 : vector<16xf32> to vector<16x1xf32>
    %cst_9 = arith.constant 6.250000e-02 : f32
    %18 = vector.broadcast %cst_9 : f32 to vector<16x1xf32>
    %19 = arith.mulf %14, %18 : vector<16x1xf32>
    %cst_10 = arith.constant 6.250000e-02 : f32
    %20 = vector.broadcast %cst_10 : f32 to vector<16x1xf32>
    %21 = arith.mulf %17, %20 : vector<16x1xf32>
    %22 = arith.mulf %19, %19 : vector<16x1xf32>
    %23 = arith.subf %21, %22 : vector<16x1xf32>
    %24 = vector.broadcast %19 : vector<16x1xf32> to vector<16x16xf32>
    %25 = arith.subf %12, %24 : vector<16x16xf32>
    %cst_11 = arith.constant 9.99999974E-6 : f32
    %26 = vector.broadcast %cst_11 : f32 to vector<16x1xf32>
    %27 = arith.addf %23, %26 : vector<16x1xf32>
    %28 = math.rsqrt %27 : vector<16x1xf32>
    %29 = vector.broadcast %28 : vector<16x1xf32> to vector<16x16xf32>
    %30 = arith.mulf %25, %29 : vector<16x16xf32>
    %c0_12 = arith.constant 0 : index
    %c0_13 = arith.constant 0 : index
    %31 = vector.load %arg3[%c0_12, %c0_13] : memref<16x8xf32, #tpu.memory_space<vmem>>, vector<16x8xf32>
    %cst_14 = arith.constant dense<0.000000e+00> : vector<16x8xf32>
    %32 = tpu.matmul %30, %31, %cst_14 {dimension_numbers = #tpu.dot_dimension_numbers<[1], [0], [0], [1], [0, 0, 1, 1], [], []>} : vector<16x16xf32>, vector<16x8xf32>, vector<16x8xf32> -> vector<16x8xf32>
    %33 = vector.broadcast %3 : vector<1x8xf32> to vector<16x8xf32>
    %34 = arith.addf %32, %33 : vector<16x8xf32>
    %c0_15 = arith.constant 0 : index
    %c0_16 = arith.constant 0 : index
    %35 = vector.load %arg5[%c0_15, %c0_16] : memref<16x8xf32, #tpu.memory_space<vmem>>, vector<16x8xf32>
    tpu.vector_store %arg5[%c0_15, %c0_16], %34 {strides = array<i32>} : memref<16x8xf32, #tpu.memory_space<vmem>>, vector<16x8xf32>,
    return
  }
  func.func @transform_0(%arg0: i32) -> (i32, i32) {
    %c0_i32 = arith.constant 0 : i32
    %c0_i32_0 = arith.constant 0 : i32
    return %arg0, %c0_i32 : i32, i32
  }
  func.func @transform_1(%arg0: i32) -> (i32, i32) {
    %c0_i32 = arith.constant 0 : i32
    %c0_i32_0 = arith.constant 0 : i32
    %c0_i32_1 = arith.constant 0 : i32
    return %c0_i32, %c0_i32_0 : i32, i32
  }
  func.func @transform_2(%arg0: i32) -> (i32, i32) {
    %c0_i32 = arith.constant 0 : i32
    %c0_i32_0 = arith.constant 0 : i32
    %c0_i32_1 = arith.constant 0 : i32
    return %c0_i32, %c0_i32_0 : i32, i32
  }
  func.func @transform_3(%arg0: i32) -> (i32, i32) {
    %c0_i32 = arith.constant 0 : i32
    %c0_i32_0 = arith.constant 0 : i32
    %c0_i32_1 = arith.constant 0 : i32
    return %c0_i32, %c0_i32_0 : i32, i32
  }
  func.func @transform_4(%arg0: i32) -> (i32, i32) {
    %c0_i32 = arith.constant 0 : i32
    %c0_i32_0 = arith.constant 0 : i32
    return %arg0, %c0_i32 : i32, i32
  }
}

</mosaic_0001>

<llo_original>
// kernel: mymodel2_forward.1
$region0: #{mymodel2_forward.1}
  #allocation0 [shape = 'u32[]', space=smem, size = 0x4, offset = 0x4, fixed_abs, tag = 'smem constant byte address 0x4 - core index']
  #allocation1 [shape = 'u32[144,128]{1,0:T(1,128)}', space=vmem, size = 0x12000, scoped, tag = 'internal scratch']
  %s0 = inlined_call_operand.vmem [shape: f32[16,32], index: 0, kind: input, shape index: {}]
  %s1 = inlined_call_operand.vmem [shape: f32[32,16], index: 1, kind: input, shape index: {}]
  %s2 = inlined_call_operand.vmem [shape: f32[16,8], index: 2, kind: input, shape index: {}]
  %s3 = inlined_call_operand.vmem [shape: f32[1,24], index: 3, kind: input, shape index: {}]
  %s4 = inlined_call_operand.hbm [shape: f32[16,8], index: 4, kind: output, shape index: {}]
  %s5 = sld [smem:[#allocation0]]
  $region26: #{mymodel2_forward.1} parent=0
    _
  %s7 = ssub.s32 1, %s5
  %s8 = scalar_select 0, %s7, %s5
  $region1: #{mymodel2_forward.1} parent=0
    #allocation2 [shape = 'u8[8192]{0}', space=vmem, size = 0x2000, scoped, tag = 'output window, operand 0, single buffered']
    #allocation3 [shape = 's32[1]{0}', space=sflag, size = 0x4, scoped, tag = 'scoped memory for mymodel2_forward.1']
    %9 = vsyncpa [#allocation3], 0
    // Predicated region
    $region2: #{mymodel2_forward.1} parent=1 // pred_check
      _
    $region3: #{mymodel2_forward.1} parent=1 // pred_check_branch
      %11 = sbr.rel (0) target = $region5
    $region4: #{mymodel2_forward.1} parent=1 // pred_region
      _
    $region5: #{mymodel2_forward.1} parent=1 // pred_fallthru
      _
    // Predicated region
    $region6: #{mymodel2_forward.1} parent=1 // pred_check
      _
    $region7: #{mymodel2_forward.1} parent=1 // pred_check_branch
      %13 = sbr.rel (0) target = $region9
    $region8: #{mymodel2_forward.1} parent=1 // pred_region
      _
    $region9: #{mymodel2_forward.1} parent=1 // pred_fallthru
      _
    // Predicated region
    $region10: #{mymodel2_forward.1} parent=1 // pred_check
      _
    $region11: #{mymodel2_forward.1} parent=1 // pred_check_branch
      %15 = sbr.rel (0) target = $region13
    $region12: #{mymodel2_forward.1} parent=1 // pred_region
      _
    $region13: #{mymodel2_forward.1} parent=1 // pred_fallthru
      _
    // Predicated region
    $region14: #{mymodel2_forward.1} parent=1 // pred_check
      _
    $region15: #{mymodel2_forward.1} parent=1 // pred_check_branch
      %17 = sbr.rel (0) target = $region17
    $region16: #{mymodel2_forward.1} parent=1 // pred_region
      _
    $region17: #{mymodel2_forward.1} parent=1 // pred_fallthru
      _
    %v18 = vld [vmem:[%s0] sm:$0xff]
    %v19 = vld [vmem:[%s0 + $0x8] sm:$0xff]
    %v20 = vld [vmem:[%s3] sm:$0x1]
    %v21 = vld [vmem:[%s1] sm:$0xff]
    %v22 = vld [vmem:[%s1 + $0x8] sm:$0xff]
    %v23 = vld [vmem:[%s1 + $0x10] sm:$0xff]
    %v24 = vld [vmem:[%s1 + $0x18] sm:$0xff]
    %v26 = vlaneseq
    %v27 = vshrl.u32 %v26, 7
    %v28 = vsub.s32 0, %v27
    %v29 = vrot.slane %v20, %v28
    %vm31 = vcmask 261120
    %v33 = vsel %vm31, %v18, 0
    %v36 = vsel %vm31, %v19, 0
    %38 = vmatprep.subr.mxu0 0.0
    %39 = vmatpush1.msra.mxu0 0.0
    %40 = vmatprep.subr.mxu0 0.0
    %41 = vmatpush1.msra.mxu0 0.0
    %42 = vmatprep.subr.mxu0 0.0
    %43 = vmatpush1.msra.mxu0 0.0
    %44 = vmatprep.subr.mxu0 0.0
    %45 = vmatpush1.msra.mxu0 0.0
    %46 = vmatprep.subr.mxu0 0.0
    %47 = vmatpush1.msra.mxu0 0.0
    %48 = vmatprep.subr.mxu0 0.0
    %49 = vmatpush1.msra.mxu0 0.0
    %50 = vmatprep.subr.mxu0 0.0
    %51 = vmatpush1.msra.mxu0 0.0
    %52 = vmatprep.subr.mxu0 0.0
    %53 = vmatpush1.msra.mxu0 0.0
    %54 = vmatprep.subr.mxu0 0.0
    %55 = vmatpush1.msra.mxu0 0.0
    %56 = vmatprep.subr.mxu0 0.0
    %57 = vmatpush1.msra.mxu0 0.0
    %58 = vmatprep.subr.mxu0 0.0
    %59 = vmatpush1.msra.mxu0 0.0
    %60 = vmatprep.subr.mxu0 0.0
    %61 = vmatpush1.msra.mxu0 0.0
    %62 = vmatprep.subr.mxu0 0.0
    %63 = vmatpush1.msra.mxu0 %v24
    %64 = vmatprep.subr.mxu0 0.0
    %65 = vmatpush1.msra.mxu0 %v23
    %66 = vmatprep.subr.mxu0 0.0
    %67 = vmatpush1.msra.mxu0 %v22
    %68 = vmatprep.subr.mxu0 0.0
    %69 = vmatpush1.msra.mxu0 %v21
    %70 = vmatprep.subr.mxu0 0.0
    %71 = vmatpush2.msra.mxu0 0.0
    %72 = vmatprep.subr.mxu0 0.0
    %73 = vmatpush2.msra.mxu0 0.0
    %74 = vmatprep.subr.mxu0 0.0
    %75 = vmatpush2.msra.mxu0 0.0
    %76 = vmatprep.subr.mxu0 0.0
    %77 = vmatpush2.msra.mxu0 0.0
    %78 = vmatprep.subr.mxu0 0.0
    %79 = vmatpush2.msra.mxu0 0.0
    %80 = vmatprep.subr.mxu0 0.0
    %81 = vmatpush2.msra.mxu0 0.0
    %82 = vmatprep.subr.mxu0 0.0
    %83 = vmatpush2.msra.mxu0 0.0
    %84 = vmatprep.subr.mxu0 0.0
    %85 = vmatpush2.msra.mxu0 0.0
    %86 = vmatprep.subr.mxu0 0.0
    %87 = vmatpush2.msra.mxu0 0.0
    %88 = vmatprep.subr.mxu0 0.0
    %89 = vmatpush2.msra.mxu0 0.0
    %90 = vmatprep.subr.mxu0 0.0
    %91 = vmatpush2.msra.mxu0 0.0
    %92 = vmatprep.subr.mxu0 0.0
    %93 = vmatpush2.msra.mxu0 0.0
    %94 = vmatprep.subr.mxu0 0.0
    %95 = vmatpush2.msra.mxu0 0.0
    %96 = vmatprep.subr.mxu0 0.0
    %97 = vmatpush2.msra.mxu0 0.0
    %98 = vmatprep.subr.mxu0 0.0
    %99 = vmatpush2.msra.mxu0 0.0
    %100 = vmatprep.subr.mxu0 0.0
    %101 = vmatpush2.msra.mxu0 0.0
    %102 = vmatprep.mubr.f32.mxu0 0.0
    %103 = vmatmul.mubr.f32.gmra.mxu0 %v33
    %v104 = vpop.f32.mrf.mxu0
    %v105 = vadd.f32 %v29, %v104
    %v106 = vpop.f32.mrf.mxu0
    %107 = vmatprep.mubr.f32.mxu0 0.0
    %108 = vmatmul.mubr.f32.gmra.mxu0 %v36
    %v109 = vpop.f32.mrf.mxu0
    %v110 = vadd.f32 %v29, %v109
    %v111 = vpop.f32.mrf.mxu0
    %112 = vdwg.mxu0
    %vm113 = vcmp.ge.f32.partialorder %v105, 0.0
    %vm114 = vcmp.ge.f32.partialorder %v110, 0.0
    %v115 = vmul.f32 %v105, 0.2
    %v116 = vmul.f32 %v110, 0.2
    %v117 = vsel %vm113, %v105, %v115
    %v118 = vsel %vm114, %v110, %v116
    %vm119 = vcmask 130048
    %v120 = vsel %vm119, %v117, 0.0
    %121 = vadd.xlane.f32.xlu0 %v120
    %v122 = vpop.xlane.xlu0 %121
    %v123 = vsel %vm119, %v118, 0.0
    %124 = vadd.xlane.f32.xlu0 %v123
    %v125 = vpop.xlane.xlu0 %124
    %v126 = vmul.f32 %v117, %v117
    %v127 = vmul.f32 %v118, %v118
    %v128 = vsel %vm119, %v126, 0.0
    %129 = vadd.xlane.f32.xlu0 %v128
    %v130 = vpop.xlane.xlu0 %129
    %v131 = vsel %vm119, %v127, 0.0
    %132 = vadd.xlane.f32.xlu0 %v131
    %v133 = vpop.xlane.xlu0 %132
    %v134 = vmul.f32 %v122, 0.0625
    %v135 = vmul.f32 %v125, 0.0625
    %v136 = vmul.f32 %v130, 0.0625
    %v137 = vmul.f32 %v133, 0.0625
    %v138 = vmul.f32 %v134, %v134
    %v139 = vmul.f32 %v135, %v135
    %v140 = vsub.f32 %v136, %v138
    %v141 = vsub.f32 %v137, %v139
    %v142 = vsub.f32 %v117, %v134
    %v143 = vsub.f32 %v118, %v135
    %v144 = vadd.f32 %v140, 1e-05
    %v145 = vadd.f32 %v141, 1e-05
    %v146 = vrsqrt.pop %v144
    %v147 = vrsqrt.pop %v145
    %v148 = vmul.f32 %v142, %v146
    %v149 = vmul.f32 %v143, %v147
    %v150 = vld [vmem:[%s2] sm:$0xff]
    %v151 = vld [vmem:[%s2 + $0x8] sm:$0xff]
    %152 = vrot.lane.b32.xlu0 %v29, 112
    %v153 = vpop.permute.xlu0 %152
    %v156 = vsel %vm119, %v148, 0
    %v159 = vsel %vm119, %v149, 0
    %161 = vmatprep.subr.mxu0 0.0
    %162 = vmatpush1.msra.mxu0 0.0
    %163 = vmatprep.subr.mxu0 0.0
    %164 = vmatpush1.msra.mxu0 0.0
    %165 = vmatprep.subr.mxu0 0.0
    %166 = vmatpush1.msra.mxu0 0.0
    %167 = vmatprep.subr.mxu0 0.0
    %168 = vmatpush1.msra.mxu0 0.0
    %169 = vmatprep.subr.mxu0 0.0
    %170 = vmatpush1.msra.mxu0 0.0
    %171 = vmatprep.subr.mxu0 0.0
    %172 = vmatpush1.msra.mxu0 0.0
    %173 = vmatprep.subr.mxu0 0.0
    %174 = vmatpush1.msra.mxu0 0.0
    %175 = vmatprep.subr.mxu0 0.0
    %176 = vmatpush1.msra.mxu0 0.0
    %177 = vmatprep.subr.mxu0 0.0
    %178 = vmatpush1.msra.mxu0 0.0
    %179 = vmatprep.subr.mxu0 0.0
    %180 = vmatpush1.msra.mxu0 0.0
    %181 = vmatprep.subr.mxu0 0.0
    %182 = vmatpush1.msra.mxu0 0.0
    %183 = vmatprep.subr.mxu0 0.0
    %184 = vmatpush1.msra.mxu0 0.0
    %185 = vmatprep.subr.mxu0 0.0
    %186 = vmatpush1.msra.mxu0 0.0
    %187 = vmatprep.subr.mxu0 0.0
    %188 = vmatpush1.msra.mxu0 0.0
    %189 = vmatprep.subr.mxu0 0.0
    %190 = vmatpush1.msra.mxu0 %v151
    %191 = vmatprep.subr.mxu0 0.0
    %192 = vmatpush1.msra.mxu0 %v150
    %193 = vmatprep.subr.mxu0 0.0
    %194 = vmatpush2.msra.mxu0 0.0
    %195 = vmatprep.subr.mxu0 0.0
    %196 = vmatpush2.msra.mxu0 0.0
    %197 = vmatprep.subr.mxu0 0.0
    %198 = vmatpush2.msra.mxu0 0.0
    %199 = vmatprep.subr.mxu0 0.0
    %200 = vmatpush2.msra.mxu0 0.0
    %201 = vmatprep.subr.mxu0 0.0
    %202 = vmatpush2.msra.mxu0 0.0
    %203 = vmatprep.subr.mxu0 0.0
    %204 = vmatpush2.msra.mxu0 0.0
    %205 = vmatprep.subr.mxu0 0.0
    %206 = vmatpush2.msra.mxu0 0.0
    %207 = vmatprep.subr.mxu0 0.0
    %208 = vmatpush2.msra.mxu0 0.0
    %209 = vmatprep.subr.mxu0 0.0
    %210 = vmatpush2.msra.mxu0 0.0
    %211 = vmatprep.subr.mxu0 0.0
    %212 = vmatpush2.msra.mxu0 0.0
    %213 = vmatprep.subr.mxu0 0.0
    %214 = vmatpush2.msra.mxu0 0.0
    %215 = vmatprep.subr.mxu0 0.0
    %216 = vmatpush2.msra.mxu0 0.0
    %217 = vmatprep.subr.mxu0 0.0
    %218 = vmatpush2.msra.mxu0 0.0
    %219 = vmatprep.subr.mxu0 0.0
    %220 = vmatpush2.msra.mxu0 0.0
    %221 = vmatprep.subr.mxu0 0.0
    %222 = vmatpush2.msra.mxu0 0.0
    %223 = vmatprep.subr.mxu0 0.0
    %224 = vmatpush2.msra.mxu0 0.0
    %225 = vmatprep.mubr.f32.mxu0 0.0
    %226 = vmatmul.mubr.f32.gmra.mxu0 %v156
    %v227 = vpop.f32.mrf.mxu0
    %v228 = vadd.f32 %v153, %v227
    %v229 = vpop.f32.mrf.mxu0
    %230 = vmatprep.mubr.f32.mxu0 0.0
    %231 = vmatmul.mubr.f32.gmra.mxu0 %v159
    %v232 = vpop.f32.mrf.mxu0
    %v233 = vadd.f32 %v153, %v232
    %v234 = vpop.f32.mrf.mxu0
    %235 = vdwg.mxu0
    %vm236 = vcmask 64512
    %237 = vst.msk [vmem:[#allocation2] sm:$0xff] %vm236, %v228
    %238 = vst.msk [vmem:[#allocation2 + $0x8] sm:$0xff] %vm236, %v233
    // Predicated region
    $region18: #{mymodel2_forward.1} parent=1 // pred_check
      _
    $region19: #{mymodel2_forward.1} parent=1 // pred_check_branch
      %240 = sbr.rel (0) target = $region21
    $region20: #{mymodel2_forward.1} parent=1 // pred_region
      %s242 = ssub.s32 256, 256
      %243 = vsyncadd [#allocation3], %s242
      %s244 = sshll.u32 [#allocation2], 4
      %s245 = int_to_ptr.vmem [resolvable:$true] %s244
      %250 = dma.vmem_to_hbm [thread:$0]  %s245, 256, %s4, [#allocation3], 128, 128, 8
    $region21: #{mymodel2_forward.1} parent=1 // pred_fallthru
      _
    // Predicated region
    $region22: #{mymodel2_forward.1} parent=1 // pred_check
      _
    $region23: #{mymodel2_forward.1} parent=1 // pred_check_branch
      %252 = sbr.rel (0) target = $region25
    $region24: #{mymodel2_forward.1} parent=1 // pred_region
      %253 = dma.done [#allocation3], 256
    $region25: #{mymodel2_forward.1} parent=1 // pred_fallthru
      _
    %254 = vsyncpa [#allocation3], 1

</llo_original>
